<compile_context>
chip_gen: v5e
topology: v5e:2x2
jax: 0.10.0
libtpu: 0.0.40
codegen_flags: <defaults>
</compile_context>

<pallas_src>
from functools import partial

import jax
import jax.numpy as jnp
from jax.experimental import pallas as pl
from jax.experimental.pallas import tpu as pltpu

_NEG_BIG = -1e30  # padded-logit bias: exp(pad - max) == 0 exactly in f32


def ldu_kernel(x_ref, w1_ref, b1_ref, w2_ref, b2_ref, o_ref):
    # l1: Linear(input_size -> hidden_pad) on the MXU
    h = jnp.dot(x_ref[...], w1_ref[...], preferred_element_type=jnp.float32)
    h = h + b1_ref[...]                                    # (TM, Hp) + (1, Hp)
    # sigmoid: exp on EUP, reciprocal instead of a VALU divide
    h = pl.reciprocal(1.0 + jnp.exp(-h), approx=False)
    # l3: Linear(hidden_pad -> out_pad); padded W2 rows are zero, padded
    # columns are zero with a -1e30 bias so they vanish under softmax.
    logits = jnp.dot(h, w2_ref[...], preferred_element_type=jnp.float32)
    logits = logits + b2_ref[...]                          # (TM, Op) + (1, Op)
    # softmax over the class axis (lane axis, Op = multiple of 128)
    m = jnp.max(logits, axis=-1, keepdims=True)
    e = jnp.exp(logits - m)
    inv = pl.reciprocal(jnp.sum(e, axis=-1, keepdims=True), approx=False)
    p = e * inv
    # store only the real classes (true-width output, masked vst)
    o_ref[...] = p[:, : o_ref.shape[-1]].astype(o_ref.dtype)


def _round_up(a, m):
    return (a + m - 1) // m * m


def prepare_params(w1, b1, w2, b2):
    """One-time lane-alignment of the weights (hoisted out of the hot path).

    w1: (In, H), b1: (1, H), w2: (H, O), b2: (1, O)  ->  padded copies with
    H -> round_up(H, 128), O -> round_up(O, 128).  Returns (params, O).
    """
    H = w1.shape[1]
    O = w2.shape[1]
    H_pad = _round_up(H, 128)
    O_pad = _round_up(O, 128)
    w1_p = jnp.pad(w1, ((0, 0), (0, H_pad - H)))
    b1_p = jnp.pad(b1, ((0, 0), (0, H_pad - H)))
    w2_p = jnp.pad(w2, ((0, H_pad - H), (0, O_pad - O)))
    b2_p = jnp.pad(b2, ((0, 0), (0, O_pad - O)), constant_values=_NEG_BIG)
    return (w1_p, b1_p, w2_p, b2_p), O


@partial(jax.jit, static_argnames=("out_features", "tile_m"))
def ldu_forward(x, w1_p, b1_p, w2_p, b2_p, *, out_features, tile_m=1024):
    """x: (B, In); padded params from prepare_params; returns (B, out_features)."""
    B, In = x.shape
    H_pad = w1_p.shape[1]
    O_pad = w2_p.shape[1]
    O = out_features

    # Batch tile: large to amortize per-step overhead / hit the HBM roofline,
    # but force >= 2 grid steps whenever B >= 16 so both v7x TensorCores are
    # busy under dimension_semantics=("parallel",).  Cap at tile_m (default
    # 1024) to stay comfortably inside v5e/v7x VMEM budgets.
    if B >= 16:
        tm = _round_up(pl.cdiv(B, 2), 8)
    else:
        tm = _round_up(B, 8)
    tm = max(8, min(tile_m, tm))
    grid = (pl.cdiv(B, tm),)  # no batch over-padding; partial last block is masked

    return pl.pallas_call(
        ldu_kernel,
        out_shape=jax.ShapeDtypeStruct((B, O), jnp.float32),
        grid_spec=pltpu.PrefetchScalarGridSpec(
            num_scalar_prefetch=0,
            grid=grid,
            in_specs=[
                pl.BlockSpec((tm, In), lambda i: (i, 0)),        # x tile
                pl.BlockSpec((In, H_pad), lambda i: (0, 0)),     # W1 (resident)
                pl.BlockSpec((1, H_pad), lambda i: (0, 0)),      # b1
                pl.BlockSpec((H_pad, O_pad), lambda i: (0, 0)),  # W2 (resident)
                pl.BlockSpec((1, O_pad), lambda i: (0, 0)),      # b2
            ],
            out_specs=pl.BlockSpec((tm, O), lambda i: (i, 0)),   # true-width out
        ),
        compiler_params=pltpu.CompilerParams(
            dimension_semantics=("parallel",),
        ),
    )(x, w1_p, b1_p, w2_p, b2_p)


def init_params(key, input_size, n_classes, hidden_size=200):
    """Synthetic init mimicking nn.Linear's uniform(-1/sqrt(fan_in), 1/sqrt(fan_in))."""
    output_size = n_classes + 1
    k1, k2, k3, k4 = jax.random.split(key, 4)
    bound1 = 1.0 / jnp.sqrt(jnp.float32(input_size))
    bound2 = 1.0 / jnp.sqrt(jnp.float32(hidden_size))
    # stored pre-transposed: (in_features, out_features)
    w1 = jax.random.uniform(k1, (input_size, hidden_size), jnp.float32, -bound1, bound1)
    b1 = jax.random.uniform(k2, (1, hidden_size), jnp.float32, -bound1, bound1)
    w2 = jax.random.uniform(k3, (hidden_size, output_size), jnp.float32, -bound2, bound2)
    b2 = jax.random.uniform(k4, (1, output_size), jnp.float32, -bound2, bound2)
    return w1, b1, w2, b2


def _reference(x, w1, b1, w2, b2):
    h = jax.nn.sigmoid(x @ w1 + b1)
    return jax.nn.softmax(h @ w2 + b2, axis=1)


if __name__ == "__main__":
    # small shapes consistent with the module's forward: x is (batch, input_size)
    input_size = 32
    n_classes = 9          # -> output_size = 10
    hidden_size = 200

    key = jax.random.PRNGKey(0)
    kx, kp, kx2, kx3 = jax.random.split(key, 4)
    w1, b1, w2, b2 = init_params(kp, input_size, n_classes, hidden_size)

    # one-time padding of the parameters (out of the hot path)
    (w1_p, b1_p, w2_p, b2_p), out_features = prepare_params(w1, b1, w2, b2)

    # 1) tiny batch (single grid step)
    batch = 8
    x = jax.random.normal(kx, (batch, input_size), jnp.float32)
    out = jax.block_until_ready(
        ldu_forward(x, w1_p, b1_p, w2_p, b2_p, out_features=out_features))
    ref = _reference(x, w1, b1, w2, b2)
    assert out.shape == (batch, n_classes + 1)
    assert jnp.allclose(out, ref, atol=1e-5, rtol=1e-5)
    assert jnp.allclose(jnp.sum(out, axis=1), 1.0, atol=1e-5)

    # 2) larger batch -> >=2 grid steps (both v7x cores used)
    batch2 = 256
    x2 = jax.random.normal(kx2, (batch2, input_size), jnp.float32)
    out2 = jax.block_until_ready(
        ldu_forward(x2, w1_p, b1_p, w2_p, b2_p, out_features=out_features))
    ref2 = _reference(x2, w1, b1, w2, b2)
    assert out2.shape == (batch2, n_classes + 1)
    assert jnp.allclose(out2, ref2, atol=1e-5, rtol=1e-5)
    assert jnp.allclose(jnp.sum(out2, axis=1), 1.0, atol=1e-5)

    # 3) ragged batch (not a multiple of the tile) -> exercises the masked
    #    partial last block without any batch padding / extra x copy.
    batch3 = 300
    x3 = jax.random.normal(kx3, (batch3, input_size), jnp.float32)
    out3 = jax.block_until_ready(
        ldu_forward(x3, w1_p, b1_p, w2_p, b2_p, out_features=out_features, tile_m=128))
    ref3 = _reference(x3, w1, b1, w2, b2)
    assert out3.shape == (batch3, n_classes + 1)
    assert jnp.allclose(out3, ref3, atol=1e-5, rtol=1e-5)
    assert jnp.allclose(jnp.sum(out3, axis=1), 1.0, atol=1e-5)

    print("KERNEL_OK")
</pallas_src>

<mosaic_0001>
module attributes {stable_mosaic.version = 11 : i64} {
  func.func @ldu_kernel(%arg0: i32, %arg1: memref<8x32xf32, #tpu.memory_space<vmem>>, %arg2: memref<32x256xf32, #tpu.memory_space<vmem>>, %arg3: memref<1x256xf32, #tpu.memory_space<vmem>>, %arg4: memref<256x128xf32, #tpu.memory_space<vmem>>, %arg5: memref<1x128xf32, #tpu.memory_space<vmem>>, %arg6: memref<8x10xf32, #tpu.memory_space<vmem>>) attributes {dimension_semantics = [#tpu.dimension_semantics<parallel>], iteration_bounds = array<i64: 1>, scalar_prefetch = 0 : i64, scratch_operands = 0 : i64, tpu.core_type = #tpu.core_type<tc>, window_params = [{transform_indices = @transform_0, window_bounds = array<i64: 8, 32>}, {pipeline_mode = #tpu.pipeline_mode<synchronous>, transform_indices = @transform_1, window_bounds = array<i64: 32, 256>}, {pipeline_mode = #tpu.pipeline_mode<synchronous>, transform_indices = @transform_2, window_bounds = array<i64: 1, 256>}, {pipeline_mode = #tpu.pipeline_mode<synchronous>, transform_indices = @transform_3, window_bounds = array<i64: 256, 128>}, {pipeline_mode = #tpu.pipeline_mode<synchronous>, transform_indices = @transform_4, window_bounds = array<i64: 1, 128>}, {transform_indices = @transform_5, window_bounds = array<i64: 8, 10>}]} {
    %c0 = arith.constant 0 : index
    %c0_0 = arith.constant 0 : index
    %0 = vector.load %arg1[%c0, %c0_0] : memref<8x32xf32, #tpu.memory_space<vmem>>, vector<8x32xf32>
    %c0_1 = arith.constant 0 : index
    %c0_2 = arith.constant 0 : index
    %1 = vector.load %arg2[%c0_1, %c0_2] : memref<32x256xf32, #tpu.memory_space<vmem>>, vector<32x256xf32>
    %cst = arith.constant dense<0.000000e+00> : vector<8x256xf32>
    %2 = tpu.matmul %0, %1, %cst {dimension_numbers = #tpu.dot_dimension_numbers<[1], [0], [0], [1], [0, 0, 1, 1], [], []>} : vector<8x32xf32>, vector<32x256xf32>, vector<8x256xf32> -> vector<8x256xf32>
    %c0_3 = arith.constant 0 : index
    %c0_4 = arith.constant 0 : index
    %3 = vector.load %arg3[%c0_3, %c0_4] : memref<1x256xf32, #tpu.memory_space<vmem>>, vector<1x256xf32>
    %4 = vector.broadcast %3 : vector<1x256xf32> to vector<8x256xf32>
    %5 = arith.addf %2, %4 : vector<8x256xf32>
    %cst_5 = arith.constant 0.000000e+00 : f32
    %6 = vector.broadcast %cst_5 : f32 to vector<8x256xf32>
    %7 = arith.subf %6, %5 : vector<8x256xf32>
    %8 = math.exp %7 : vector<8x256xf32>
    %cst_6 = arith.constant 1.000000e+00 : f32
    %9 = vector.broadcast %cst_6 : f32 to vector<8x256xf32>
    %10 = arith.addf %9, %8 : vector<8x256xf32>
    %11 = tpu.reciprocal %10 : vector<8x256xf32> -> vector<8x256xf32>
    %c0_7 = arith.constant 0 : index
    %c0_8 = arith.constant 0 : index
    %12 = vector.load %arg4[%c0_7, %c0_8] : memref<256x128xf32, #tpu.memory_space<vmem>>, vector<256x128xf32>
    %cst_9 = arith.constant dense<0.000000e+00> : vector<8x128xf32>
    %13 = tpu.matmul %11, %12, %cst_9 {dimension_numbers = #tpu.dot_dimension_numbers<[1], [0], [0], [1], [0, 0, 1, 1], [], []>} : vector<8x256xf32>, vector<256x128xf32>, vector<8x128xf32> -> vector<8x128xf32>
    %c0_10 = arith.constant 0 : index
    %c0_11 = arith.constant 0 : index
    %14 = vector.load %arg5[%c0_10, %c0_11] : memref<1x128xf32, #tpu.memory_space<vmem>>, vector<1x128xf32>
    %15 = vector.broadcast %14 : vector<1x128xf32> to vector<8x128xf32>
    %16 = arith.addf %13, %15 : vector<8x128xf32>
    %cst_12 = arith.constant dense<0xFF800000> : vector<8xf32>
    %17 = vector.multi_reduction <maximumf>, %16, %cst_12 [1] : vector<8x128xf32> to vector<8xf32>
    %18 = vector.shape_cast %17 : vector<8xf32> to vector<8x1xf32>
    %19 = vector.broadcast %18 : vector<8x1xf32> to vector<8x128xf32>
    %20 = arith.subf %16, %19 : vector<8x128xf32>
    %21 = math.exp %20 : vector<8x128xf32>
    %cst_13 = arith.constant dense<0.000000e+00> : vector<8xf32>
    %22 = vector.multi_reduction <add>, %21, %cst_13 [1] : vector<8x128xf32> to vector<8xf32>
    %23 = vector.shape_cast %22 : vector<8xf32> to vector<8x1xf32>
    %24 = tpu.reciprocal %23 : vector<8x1xf32> -> vector<8x1xf32>
    %25 = vector.broadcast %24 : vector<8x1xf32> to vector<8x128xf32>
    %26 = arith.mulf %21, %25 : vector<8x128xf32>
    %27 = vector.extract_strided_slice %26 {offsets = [0, 0], sizes = [8, 10], strides = [1, 1]} : vector<8x128xf32> to vector<8x10xf32>
    %c0_14 = arith.constant 0 : index
    %c0_15 = arith.constant 0 : index
    %28 = vector.load %arg6[%c0_14, %c0_15] : memref<8x10xf32, #tpu.memory_space<vmem>>, vector<8x10xf32>
    tpu.vector_store %arg6[%c0_14, %c0_15], %27 {strides = array<i32>} : memref<8x10xf32, #tpu.memory_space<vmem>>, vector<8x10xf32>,
    return
  }
  func.func @transform_0(%arg0: i32) -> (i32, i32) {
    %c0_i32 = arith.constant 0 : i32
    %c0_i32_0 = arith.constant 0 : i32
    return %arg0, %c0_i32 : i32, i32
  }
  func.func @transform_1(%arg0: i32) -> (i32, i32) {
    %c0_i32 = arith.constant 0 : i32
    %c0_i32_0 = arith.constant 0 : i32
    %c0_i32_1 = arith.constant 0 : i32
    return %c0_i32, %c0_i32_0 : i32, i32
  }
  func.func @transform_2(%arg0: i32) -> (i32, i32) {
    %c0_i32 = arith.constant 0 : i32
    %c0_i32_0 = arith.constant 0 : i32
    %c0_i32_1 = arith.constant 0 : i32
    return %c0_i32, %c0_i32_0 : i32, i32
  }
  func.func @transform_3(%arg0: i32) -> (i32, i32) {
    %c0_i32 = arith.constant 0 : i32
    %c0_i32_0 = arith.constant 0 : i32
    %c0_i32_1 = arith.constant 0 : i32
    return %c0_i32, %c0_i32_0 : i32, i32
  }
  func.func @transform_4(%arg0: i32) -> (i32, i32) {
    %c0_i32 = arith.constant 0 : i32
    %c0_i32_0 = arith.constant 0 : i32
    %c0_i32_1 = arith.constant 0 : i32
    return %c0_i32, %c0_i32_0 : i32, i32
  }
  func.func @transform_5(%arg0: i32) -> (i32, i32) {
    %c0_i32 = arith.constant 0 : i32
    %c0_i32_0 = arith.constant 0 : i32
    return %arg0, %c0_i32 : i32, i32
  }
}

</mosaic_0001>

<llo_original>
// kernel: ldu_forward.1
$region0: #{ldu_forward.1}
  #allocation0 [shape = 'u32[]', space=smem, size = 0x4, offset = 0x4, fixed_abs, tag = 'smem constant byte address 0x4 - core index']
  #allocation1 [shape = 'u32[72,128]{1,0:T(1,128)}', space=vmem, size = 0x9000, scoped, tag = 'internal scratch']
  %s0 = inlined_call_operand.hbm [shape: f32[8,32], index: 0, kind: input, shape index: {}]
  %s1 = inlined_call_operand.hbm [shape: f32[32,256], index: 1, kind: input, shape index: {}]
  %s2 = inlined_call_operand.hbm [shape: f32[1,256], index: 2, kind: input, shape index: {}]
  %s3 = inlined_call_operand.hbm [shape: f32[256,128], index: 3, kind: input, shape index: {}]
  %s4 = inlined_call_operand.vmem [shape: f32[1,128], index: 4, kind: input, shape index: {}]
  %s5 = inlined_call_operand.hbm [shape: f32[8,10], index: 5, kind: output, shape index: {}]
  %s6 = sld [smem:[#allocation0]]
  $region46: #{ldu_forward.1} parent=0
    _
  %s8 = ssub.s32 1, %s6
  %s9 = scalar_select 0, %s8, %s6
  $region1: #{ldu_forward.1} parent=0
    #allocation2 [shape = 'u8[4096]{0}', space=vmem, size = 0x1000, scoped, tag = 'input window, operand 0, single buffered']
    #allocation3 [shape = 's32[1]{0}', space=sflag, size = 0x4, scoped, tag = 'scoped memory for ldu_forward.1']
    #allocation4 [shape = 's32[1]{0}', space=sflag, size = 0x4, scoped, tag = 'scoped memory for ldu_forward.1']
    #allocation5 [shape = 'u8[32768]{0}', space=vmem, size = 0x8000, scoped, tag = 'input window, operand 1, single buffered']
    #allocation6 [shape = 's32[1]{0}', space=sflag, size = 0x4, scoped, tag = 'scoped memory for ldu_forward.1']
    #allocation7 [shape = 'u8[1024]{0}', space=vmem, size = 0x400, scoped, tag = 'input window, operand 2, single buffered']
    #allocation8 [shape = 'u8[131072]{0}', space=vmem, size = 0x20000, scoped, tag = 'input window, operand 3, single buffered']
    #allocation9 [shape = 's32[1]{0}', space=sflag, size = 0x4, scoped, tag = 'scoped memory for ldu_forward.1']
    #allocation10 [shape = 'u8[4096]{0}', space=vmem, size = 0x1000, scoped, tag = 'output window, operand 0, single buffered']
    %10 = vsyncpa [#allocation3], 0
    %11 = vsyncpa [#allocation6], 0
    %12 = vsyncpa [#allocation9], 0
    %13 = vsyncpa [#allocation4], 0
    // Predicated region
    $region2: #{ldu_forward.1} parent=1 // pred_check
      _
    $region3: #{ldu_forward.1} parent=1 // pred_check_branch
      %15 = sbr.rel (0) target = $region5
    $region4: #{ldu_forward.1} parent=1 // pred_region
      %17 = vsyncadd [#allocation3], 0
      %s19 = sshll.u32 %s0, 4
      %s20 = int_to_ptr.hbm [resolvable:$true] %s19
      %s21 = sshll.u32 [#allocation2], 4
      %s22 = int_to_ptr.vmem [resolvable:$true] %s21
      %24 = dma.hbm_to_vmem [thread:$0]  %s20, 128, %s22, [#allocation3]
    $region5: #{ldu_forward.1} parent=1 // pred_fallthru
      _
    // Predicated region
    $region6: #{ldu_forward.1} parent=1 // pred_check
      _
    $region7: #{ldu_forward.1} parent=1 // pred_check_branch
      %26 = sbr.rel (0) target = $region9
    $region8: #{ldu_forward.1} parent=1 // pred_region
      %28 = vsyncadd [#allocation6], 0
      %s29 = sshll.u32 %s1, 4
      %s30 = int_to_ptr.hbm [resolvable:$true] %s29
      %s31 = sshll.u32 [#allocation5], 4
      %s32 = int_to_ptr.vmem [resolvable:$true] %s31
      %37 = dma.hbm_to_vmem [thread:$0]  %s30, 1024, %s32, [#allocation6], 256, 256, 16
    $region9: #{ldu_forward.1} parent=1 // pred_fallthru
      _
    // Predicated region
    $region10: #{ldu_forward.1} parent=1 // pred_check
      _
    $region11: #{ldu_forward.1} parent=1 // pred_check_branch
      %39 = sbr.rel (0) target = $region13
    $region12: #{ldu_forward.1} parent=1 // pred_region
      %41 = vsyncadd [#allocation6], 0
      %s43 = sshll.u32 %s2, 4
      %s44 = int_to_ptr.hbm [resolvable:$true] %s43
      %s45 = sshll.u32 [#allocation7], 4
      %s46 = int_to_ptr.vmem [resolvable:$true] %s45
      %48 = dma.hbm_to_vmem [thread:$0]  %s44, 32, %s46, [#allocation6]
    $region13: #{ldu_forward.1} parent=1 // pred_fallthru
      _
    // Predicated region
    $region14: #{ldu_forward.1} parent=1 // pred_check
      _
    $region15: #{ldu_forward.1} parent=1 // pred_check_branch
      %50 = sbr.rel (0) target = $region17
    $region16: #{ldu_forward.1} parent=1 // pred_region
      %52 = vsyncadd [#allocation9], 0
      %s53 = sshll.u32 %s3, 4
      %s54 = int_to_ptr.hbm [resolvable:$true] %s53
      %s55 = sshll.u32 [#allocation8], 4
      %s56 = int_to_ptr.vmem [resolvable:$true] %s55
      %61 = dma.hbm_to_vmem [thread:$0]  %s54, 4096, %s56, [#allocation9], 128, 128, 8
    $region17: #{ldu_forward.1} parent=1 // pred_fallthru
      _
    // Predicated region
    $region18: #{ldu_forward.1} parent=1 // pred_check
      _
    $region19: #{ldu_forward.1} parent=1 // pred_check_branch
      %63 = sbr.rel (0) target = $region21
    $region20: #{ldu_forward.1} parent=1 // pred_region
      _
    $region21: #{ldu_forward.1} parent=1 // pred_fallthru
      _
    // Predicated region
    $region22: #{ldu_forward.1} parent=1 // pred_check
      _
    $region23: #{ldu_forward.1} parent=1 // pred_check_branch
      %65 = sbr.rel (0) target = $region25
    $region24: #{ldu_forward.1} parent=1 // pred_region
      %67 = dma.done [#allocation3], 128
    $region25: #{ldu_forward.1} parent=1 // pred_fallthru
      _
    // Predicated region
    $region26: #{ldu_forward.1} parent=1 // pred_check
      _
    $region27: #{ldu_forward.1} parent=1 // pred_check_branch
      %69 = sbr.rel (0) target = $region29
    $region28: #{ldu_forward.1} parent=1 // pred_region
      %71 = dma.done [#allocation6], 1024
    $region29: #{ldu_forward.1} parent=1 // pred_fallthru
      _
    // Predicated region
    $region30: #{ldu_forward.1} parent=1 // pred_check
      _
    $region31: #{ldu_forward.1} parent=1 // pred_check_branch
      %73 = sbr.rel (0) target = $region33
    $region32: #{ldu_forward.1} parent=1 // pred_region
      %75 = dma.done [#allocation6], 32
    $region33: #{ldu_forward.1} parent=1 // pred_fallthru
      _
    // Predicated region
    $region34: #{ldu_forward.1} parent=1 // pred_check
      _
    $region35: #{ldu_forward.1} parent=1 // pred_check_branch
      %77 = sbr.rel (0) target = $region37
    $region36: #{ldu_forward.1} parent=1 // pred_region
      %79 = dma.done [#allocation9], 4096
    $region37: #{ldu_forward.1} parent=1 // pred_fallthru
      _
    %v80 = vld [vmem:[#allocation2] sm:$0xff]
    %v81 = vld [vmem:[#allocation5] sm:$0xff]
    %v82 = vld [vmem:[#allocation5 + $0x8] sm:$0xff]
    %v83 = vld [vmem:[#allocation5 + $0x10] sm:$0xff]
    %v84 = vld [vmem:[#allocation5 + $0x18] sm:$0xff]
    %v85 = vld [vmem:[#allocation5 + $0x20] sm:$0xff]
    %v86 = vld [vmem:[#allocation5 + $0x28] sm:$0xff]
    %v87 = vld [vmem:[#allocation5 + $0x30] sm:$0xff]
    %v88 = vld [vmem:[#allocation5 + $0x38] sm:$0xff]
    %v89 = vld [vmem:[#allocation7] sm:$0x3]
    %v91 = vperm.slane %v89, 0
    %v92 = vperm.slane %v89, 1
    %vm95 = vcmask 261120
    %v97 = vsel %vm95, %v80, 0
    %99 = vmatpush.msra.mxu0 0.0
    %100 = vmatpush.msra.mxu0 0.0
    %101 = vmatpush.msra.mxu0 0.0
    %102 = vmatpush.msra.mxu0 0.0
    %103 = vmatpush.msra.mxu0 0.0
    %104 = vmatpush.msra.mxu0 0.0
    %105 = vmatpush.msra.mxu0 0.0
    %106 = vmatpush.msra.mxu0 0.0
    %107 = vmatpush.msra.mxu0 0.0
    %108 = vmatpush.msra.mxu0 0.0
    %109 = vmatpush.msra.mxu0 0.0
    %110 = vmatpush.msra.mxu0 0.0
    %111 = vmatpush.msra.mxu0 %v87
    %112 = vmatpush.msra.mxu0 %v85
    %113 = vmatpush.msra.mxu0 %v83
    %114 = vmatpush.msra.mxu0 %v81
    %115 = vmatmul.f32.gmra.mxu0 %v97
    %v116 = vpop.f32.mrf.mxu0
    %v117 = vadd.f32 %v91, %v116
    %118 = vdwg.mxu0
    %119 = vmatpush.msra.mxu0 0.0
    %120 = vmatpush.msra.mxu0 0.0
    %121 = vmatpush.msra.mxu0 0.0
    %122 = vmatpush.msra.mxu0 0.0
    %123 = vmatpush.msra.mxu0 0.0
    %124 = vmatpush.msra.mxu0 0.0
    %125 = vmatpush.msra.mxu0 0.0
    %126 = vmatpush.msra.mxu0 0.0
    %127 = vmatpush.msra.mxu0 0.0
    %128 = vmatpush.msra.mxu0 0.0
    %129 = vmatpush.msra.mxu0 0.0
    %130 = vmatpush.msra.mxu0 0.0
    %131 = vmatpush.msra.mxu0 %v88
    %132 = vmatpush.msra.mxu0 %v86
    %133 = vmatpush.msra.mxu0 %v84
    %134 = vmatpush.msra.mxu0 %v82
    %135 = vmatmul.f32.gmra.mxu0 %v97
    %v136 = vpop.f32.mrf.mxu0
    %v137 = vadd.f32 %v92, %v136
    %138 = vdwg.mxu0
    %v139 = vsub.f32 0.0, %v117
    %v140 = vsub.f32 0.0, %v137
    %v141 = vmul.f32 %v139, 1.442695
    %v142 = vpow.pop %v141
    %v143 = vmul.f32 %v140, 1.442695
    %v144 = vpow.pop %v143
    %v145 = vadd.f32 %v142, 1.0
    %v146 = vadd.f32 %v144, 1.0
    %v147 = vrcp.pop %v145
    %v148 = vmul.f32 %v145, %v147
    %v149 = vsub.f32 1.0, %v148
    %v150 = vmul.f32 %v147, %v149
    %v151 = vadd.f32 %v147, %v150
    %vm152 = vweird.f32 %v145
    %vm153 = vweird.f32 %v147
    %vm154 = vmor %vm152, %vm153
    %v155 = vsel %vm154, %v147, %v151
    %v156 = vand.u32 2147483647, %v145
    %vm157 = vcmp.eq.f32.partialorder %v156, 8.507059e+37
    %v158 = vand.u32 %v145, 2147483648
    %v159 = vor.u32 1.1754944e-38, %v158
    %v160 = vsel %vm157, %v159, %v155
    %v161 = vrcp.pop %v146
    %v162 = vmul.f32 %v146, %v161
    %v163 = vsub.f32 1.0, %v162
    %v164 = vmul.f32 %v161, %v163
    %v165 = vadd.f32 %v161, %v164
    %vm166 = vweird.f32 %v146
    %vm167 = vweird.f32 %v161
    %vm168 = vmor %vm166, %vm167
    %v169 = vsel %vm168, %v161, %v165
    %v170 = vand.u32 2147483647, %v146
    %vm171 = vcmp.eq.f32.partialorder %v170, 8.507059e+37
    %v172 = vand.u32 %v146, 2147483648
    %v173 = vor.u32 1.1754944e-38, %v172
    %v174 = vsel %vm171, %v173, %v169
    %v175 = vld [vmem:[#allocation8] sm:$0xff]
    %v176 = vld [vmem:[#allocation8 + $0x8] sm:$0xff]
    %v177 = vld [vmem:[#allocation8 + $0x10] sm:$0xff]
    %v178 = vld [vmem:[#allocation8 + $0x18] sm:$0xff]
    %v179 = vld [vmem:[#allocation8 + $0x20] sm:$0xff]
    %v180 = vld [vmem:[#allocation8 + $0x28] sm:$0xff]
    %v181 = vld [vmem:[#allocation8 + $0x30] sm:$0xff]
    %v182 = vld [vmem:[#allocation8 + $0x38] sm:$0xff]
    %v183 = vld [vmem:[#allocation8 + $0x40] sm:$0xff]
    %v184 = vld [vmem:[#allocation8 + $0x48] sm:$0xff]
    %v185 = vld [vmem:[#allocation8 + $0x50] sm:$0xff]
    %v186 = vld [vmem:[#allocation8 + $0x58] sm:$0xff]
    %v187 = vld [vmem:[#allocation8 + $0x60] sm:$0xff]
    %v188 = vld [vmem:[#allocation8 + $0x68] sm:$0xff]
    %v189 = vld [vmem:[#allocation8 + $0x70] sm:$0xff]
    %v190 = vld [vmem:[#allocation8 + $0x78] sm:$0xff]
    %v191 = vld [vmem:[#allocation8 + $0x80] sm:$0xff]
    %v192 = vld [vmem:[#allocation8 + $0x88] sm:$0xff]
    %v193 = vld [vmem:[#allocation8 + $0x90] sm:$0xff]
    %v194 = vld [vmem:[#allocation8 + $0x98] sm:$0xff]
    %v195 = vld [vmem:[#allocation8 + $0xa0] sm:$0xff]
    %v196 = vld [vmem:[#allocation8 + $0xa8] sm:$0xff]
    %v197 = vld [vmem:[#allocation8 + $0xb0] sm:$0xff]
    %v198 = vld [vmem:[#allocation8 + $0xb8] sm:$0xff]
    %v199 = vld [vmem:[#allocation8 + $0xc0] sm:$0xff]
    %v200 = vld [vmem:[#allocation8 + $0xc8] sm:$0xff]
    %v201 = vld [vmem:[#allocation8 + $0xd0] sm:$0xff]
    %v202 = vld [vmem:[#allocation8 + $0xd8] sm:$0xff]
    %v203 = vld [vmem:[#allocation8 + $0xe0] sm:$0xff]
    %v204 = vld [vmem:[#allocation8 + $0xe8] sm:$0xff]
    %v205 = vld [vmem:[#allocation8 + $0xf0] sm:$0xff]
    %v206 = vld [vmem:[#allocation8 + $0xf8] sm:$0xff]
    %v207 = vld [vmem:[%s4] sm:$0x1]
    %v209 = vperm.slane %v207, 0
    %211 = vmatpush.msra.mxu0 %v190
    %212 = vmatpush.msra.mxu0 %v189
    %213 = vmatpush.msra.mxu0 %v188
    %214 = vmatpush.msra.mxu0 %v187
    %215 = vmatpush.msra.mxu0 %v186
    %216 = vmatpush.msra.mxu0 %v185
    %217 = vmatpush.msra.mxu0 %v184
    %218 = vmatpush.msra.mxu0 %v183
    %219 = vmatpush.msra.mxu0 %v182
    %220 = vmatpush.msra.mxu0 %v181
    %221 = vmatpush.msra.mxu0 %v180
    %222 = vmatpush.msra.mxu0 %v179
    %223 = vmatpush.msra.mxu0 %v178
    %224 = vmatpush.msra.mxu0 %v177
    %225 = vmatpush.msra.mxu0 %v176
    %226 = vmatpush.msra.mxu0 %v175
    %227 = vmatmul.f32.gmra.mxu0 %v160
    %v228 = vpop.f32.mrf.mxu0
    %v229 = vadd.f32 %v209, %v228
    %230 = vdwg.mxu0
    %231 = vmatpush.msra.mxu0 %v206
    %232 = vmatpush.msra.mxu0 %v205
    %233 = vmatpush.msra.mxu0 %v204
    %234 = vmatpush.msra.mxu0 %v203
    %235 = vmatpush.msra.mxu0 %v202
    %236 = vmatpush.msra.mxu0 %v201
    %237 = vmatpush.msra.mxu0 %v200
    %238 = vmatpush.msra.mxu0 %v199
    %239 = vmatpush.msra.mxu0 %v198
    %240 = vmatpush.msra.mxu0 %v197
    %241 = vmatpush.msra.mxu0 %v196
    %242 = vmatpush.msra.mxu0 %v195
    %243 = vmatpush.msra.mxu0 %v194
    %244 = vmatpush.msra.mxu0 %v193
    %245 = vmatpush.msra.mxu0 %v192
    %246 = vmatpush.msra.mxu0 %v191
    %247 = vmatmul.f32.gmra.mxu0 %v174
    %v248 = vpop.f32.mrf.mxu0
    %v249 = vadd.f32 %v229, %v248
    %250 = vdwg.mxu0
    %251 = vmax.xlane.f32.xlu0 %v249
    %v252 = vpop.xlane.xlu0 %251
    %v253 = vsub.f32 %v249, %v252
    %v254 = vmul.f32 %v253, 1.442695
    %v255 = vpow.pop %v254
    %256 = vadd.xlane.f32.xlu0 %v255
    %v257 = vpop.xlane.xlu0 %256
    %v258 = vrcp.pop %v257
    %v259 = vmul.f32 %v257, %v258
    %v260 = vsub.f32 1.0, %v259
    %v261 = vmul.f32 %v258, %v260
    %v262 = vadd.f32 %v258, %v261
    %vm263 = vweird.f32 %v257
    %vm264 = vweird.f32 %v258
    %vm265 = vmor %vm263, %vm264
    %v266 = vsel %vm265, %v258, %v262
    %v267 = vand.u32 2147483647, %v257
    %vm268 = vcmp.eq.f32.partialorder %v267, 8.507059e+37
    %v269 = vand.u32 %v257, 2147483648
    %v270 = vor.u32 1.1754944e-38, %v269
    %v271 = vsel %vm268, %v270, %v266
    %v272 = vmul.f32 %v255, %v271
    %vm273 = vcmask 80896
    %274 = vst.msk [vmem:[#allocation10] sm:$0xff] %vm273, %v272
    // Predicated region
    $region38: #{ldu_forward.1} parent=1 // pred_check
      _
    $region39: #{ldu_forward.1} parent=1 // pred_check_branch
      %276 = sbr.rel (0) target = $region41
    $region40: #{ldu_forward.1} parent=1 // pred_region
      %278 = vsyncadd [#allocation4], 0
      %s280 = sshll.u32 [#allocation10], 4
      %s281 = int_to_ptr.vmem [resolvable:$true] %s280
      %s282 = sshll.u32 %s5, 4
      %s283 = int_to_ptr.hbm [resolvable:$true] %s282
      %285 = dma.vmem_to_hbm [thread:$0]  %s281, 128, %s283, [#allocation4]
    $region41: #{ldu_forward.1} parent=1 // pred_fallthru
      _
    // Predicated region
    $region42: #{ldu_forward.1} parent=1 // pred_check
      _
    $region43: #{ldu_forward.1} parent=1 // pred_check_branch
      %287 = sbr.rel (0) target = $region45
    $region44: #{ldu_forward.1} parent=1 // pred_region
      %289 = dma.done [#allocation4], 128
    $region45: #{ldu_forward.1} parent=1 // pred_fallthru
      _
    %290 = vsyncpa [#allocation3], 1
    %291 = vsyncpa [#allocation6], 1
    %292 = vsyncpa [#allocation9], 1
    %293 = vsyncpa [#allocation4], 1

</llo_original>
